<compile_context>
chip_gen: v6e
topology: v6e:2x2x1
jax: 0.10.0
libtpu: 0.0.40
codegen_flags: <defaults>
</compile_context>

<pallas_src>
import math

import jax
import jax.numpy as jnp
from jax.experimental import pallas as pl
from jax.experimental.pallas import tpu as pltpu


# ----------------------------- Pallas kernel --------------------------------------

def gcn_agg_kernel(a_ref, x_ref, w_ref, o_ref, acc_ref):
    """Fused out = relu(A_hat @ (X @ W)) tile with f32 VMEM accumulator."""
    @pl.when(pl.program_id(2) == 0)
    def _():
        acc_ref[...] = jnp.zeros_like(acc_ref)

    # Per reduction tile: XW_tile = X_tile @ W  (tiny K, MXU f32 accumulation).
    xw = jnp.dot(x_ref[...], w_ref[...], preferred_element_type=jnp.float32)
    # Main HBM-bound matmul: acc += A_tile @ XW_tile.
    acc_ref[...] += jnp.dot(
        a_ref[...], xw.astype(jnp.bfloat16), preferred_element_type=jnp.float32
    )

    @pl.when(pl.program_id(2) == pl.num_programs(2) - 1)
    def _():
        o_ref[...] = jnp.maximum(acc_ref[...], 0.0).astype(o_ref.dtype)


# ----------------------------- tiling / budgets ------------------------------------

def _round_up(x, m):
    return ((x + m - 1) // m) * m


def _vmem_budget_bytes():
    """~3/4 of physical VMEM (64 MiB fallback covers v7x, the tightest gen)."""
    try:
        cap = int(pltpu.get_tpu_info().vmem_capacity_bytes)
    except Exception:  # interpret mode / older backends
        cap = 64 << 20
    return (cap // 4) * 3


def _live_bytes(tm, tk, tn, f_in_pad):
    a = 2 * tm * tk * 2            # A_hat bf16, double-buffered
    xb = 2 * tk * f_in_pad * 2     # X bf16, double-buffered
    wb = 2 * f_in_pad * tn * 2     # W bf16, double-buffered
    ob = 2 * tm * tn * 4           # f32 output, double-buffered
    acc = tm * tn * 4              # f32 accumulator scratch
    return a + xb + wb + ob + acc


def _select_tiles(n, f_in, f_out, vmem_budget):
    f_in_pad = _round_up(f_in, 128)
    f_out_pad = _round_up(f_out, 128)
    n_min_pad = _round_up(n, 128)

    # Full output width so A_hat is streamed once; shrink only if VMEM-forced.
    tn = f_out_pad
    while tn > 128 and _live_bytes(128, 128, tn, f_in_pad) > vmem_budget:
        tn = max(128, (tn // 2 // 128) * 128)
        while f_out_pad % tn != 0:
            tn -= 128

    # Largest square row/reduction tile that fits the VMEM budget and does not
    # over-pad N by more than ~25% of its minimal 128-padding.
    t = 128
    pad_cap = n_min_pad + n_min_pad // 4
    for cand in (2048, 1024, 512, 256, 128):
        if (cand <= n_min_pad
                and _round_up(n, cand) <= pad_cap
                and _live_bytes(cand, cand, tn, f_in_pad) <= vmem_budget):
            t = cand
            break
    n_pad = _round_up(n, t)
    tm, tk = t, t

    # Keep >=2 blocks on a parallel axis for v7x megacore when possible.
    if (n_pad // tm) < 2 and (f_out_pad // tn) < 2 and tm >= 256:
        tm //= 2

    return n_pad, f_in_pad, f_out_pad, tm, tk, tn


# ----------------------------- adjacency (plain JAX glue) --------------------------

def build_normalized_adjacency_padded(edge_index, edge_weight, num_nodes, n_pad,
                                       improved=True, out_dtype=jnp.bfloat16):
    """Dense padded A_hat with exactly the GCNConv normalization (incl. self loops).

    Scattered directly into the zero-padded out_dtype buffer -> no extra
    pad/cast pass over N^2 bytes.
    """
    row, col = edge_index[0], edge_index[1]
    if edge_weight is None:
        edge_weight = jnp.ones((edge_index.shape[1],), dtype=jnp.float32)
    ew = edge_weight.reshape(-1).astype(jnp.float32)

    # add_self_loops + loop_weight (= 2 because improved=True)
    loop_idx = jnp.arange(num_nodes, dtype=row.dtype)
    row = jnp.concatenate([row, loop_idx])
    col = jnp.concatenate([col, loop_idx])
    loop_w = jnp.full((num_nodes,), 2.0 if improved else 1.0, dtype=jnp.float32)
    ew = jnp.concatenate([ew, loop_w])

    # deg = scatter_add(edge_weight, row); deg_inv = deg**-0.5 with inf -> 0
    deg = jnp.zeros((num_nodes,), dtype=jnp.float32).at[row].add(ew)
    deg_inv = deg ** -0.5
    deg_inv = jnp.where(jnp.isinf(deg_inv), 0.0, deg_inv)
    norm = (deg_inv[row] * ew * deg_inv[col]).astype(out_dtype)

    return jnp.zeros((n_pad, n_pad), out_dtype).at[row, col].add(norm)


def glorot_weight(key, in_channels, out_channels, dtype=jnp.float32):
    stdv = math.sqrt(6.0 / (in_channels + out_channels))
    return jax.random.uniform(key, (in_channels, out_channels),
                              minval=-stdv, maxval=stdv, dtype=dtype)


# ----------------------------- forward wrapper -------------------------------------

def gcn_conv_forward(x, edge_index, weight, edge_weight=None, improved=True):
    n, f_in = x.shape
    f_out = weight.shape[1]

    vmem_budget = _vmem_budget_bytes()
    n_pad, f_in_pad, f_out_pad, tm, tk, tn = _select_tiles(n, f_in, f_out, vmem_budget)
    grid_i = n_pad // tm
    grid_j = f_out_pad // tn
    grid_k = n_pad // tk

    # Padded bf16 operands (zero padding keeps the math exact: padded A rows/cols,
    # X rows/cols and W rows/cols are zero, so real outputs are untouched).
    a_p = build_normalized_adjacency_padded(
        edge_index, edge_weight, n, n_pad, improved=improved, out_dtype=jnp.bfloat16)
    x_p = jnp.zeros((n_pad, f_in_pad), jnp.bfloat16).at[:n, :f_in].set(
        x.astype(jnp.bfloat16))
    w_p = jnp.zeros((f_in_pad, f_out_pad), jnp.bfloat16).at[:f_in, :f_out].set(
        weight.astype(jnp.bfloat16))

    # Cost estimate accounting for block re-reads across the grid.
    flops = (2 * n_pad * n_pad * f_out_pad                      # A @ XW
             + 2 * n_pad * f_in_pad * f_out_pad * grid_i)       # fused XW recompute
    bytes_accessed = (
        n_pad * n_pad * 2 * grid_j                              # A_hat
        + n_pad * f_in_pad * 2 * grid_i * grid_j                # X
        + f_in_pad * f_out_pad * 2 * grid_i * grid_j            # W
        + n_pad * f_out_pad * jnp.dtype(x.dtype).itemsize       # output
    )

    out_p = pl.pallas_call(
        gcn_agg_kernel,
        out_shape=jax.ShapeDtypeStruct((n_pad, f_out_pad), x.dtype),
        grid=(grid_i, grid_j, grid_k),
        in_specs=[
            pl.BlockSpec((tm, tk), lambda i, j, k: (i, k)),         # A_hat tile
            pl.BlockSpec((tk, f_in_pad), lambda i, j, k: (k, 0)),   # X tile
            pl.BlockSpec((f_in_pad, tn), lambda i, j, k: (0, j)),   # W tile
        ],
        out_specs=pl.BlockSpec((tm, tn), lambda i, j, k: (i, j)),
        scratch_shapes=[pltpu.VMEM((tm, tn), jnp.float32)],
        compiler_params=pltpu.CompilerParams(
            dimension_semantics=("parallel", "parallel", "arbitrary"),
            vmem_limit_bytes=int(vmem_budget)),
        cost_estimate=pl.CostEstimate(
            flops=int(flops), transcendentals=0, bytes_accessed=int(bytes_accessed)),
    )(a_p, x_p, w_p)

    return out_p[:n, :f_out]


# ----------------------------------- main ------------------------------------------

if __name__ == "__main__":
    key = jax.random.PRNGKey(0)
    k_x, k_w, k_src, k_dst = jax.random.split(key, 4)

    num_nodes = 16
    in_channels = 8
    out_channels = 32
    num_edges = 40

    x = jax.random.normal(k_x, (num_nodes, in_channels), dtype=jnp.float32)
    weight = glorot_weight(k_w, in_channels, out_channels)

    # deterministic small random graph
    src = jax.random.randint(k_src, (num_edges,), 0, num_nodes, dtype=jnp.int32)
    dst = jax.random.randint(k_dst, (num_edges,), 0, num_nodes, dtype=jnp.int32)
    edge_index = jnp.stack([src, dst], axis=0)   # [2, E]

    out = gcn_conv_forward(x, edge_index, weight)
    out = jax.block_until_ready(out)

    # pure-JAX f32 reference of the same math (bf16 operands loosen the tolerance)
    a_hat_f32 = build_normalized_adjacency_padded(
        edge_index, None, num_nodes, num_nodes, improved=True, out_dtype=jnp.float32)
    ref = jnp.maximum(a_hat_f32 @ (x @ weight), 0.0)

    assert out.shape == (num_nodes, out_channels)
    assert jnp.allclose(out, ref, atol=5e-2, rtol=5e-2)

    print("KERNEL_OK")
</pallas_src>

<mosaic_0001>
module attributes {stable_mosaic.version = 11 : i64} {
  func.func @gcn_agg_kernel(%arg0: i32, %arg1: i32, %arg2: i32, %arg3: memref<128x128xbf16, #tpu.memory_space<vmem>>, %arg4: memref<128x128xbf16, #tpu.memory_space<vmem>>, %arg5: memref<128x128xbf16, #tpu.memory_space<vmem>>, %arg6: memref<128x128xf32, #tpu.memory_space<vmem>>, %arg7: memref<128x128xf32, #tpu.memory_space<vmem>>) attributes {dimension_semantics = [#tpu.dimension_semantics<parallel>, #tpu.dimension_semantics<parallel>, #tpu.dimension_semantics<arbitrary>], iteration_bounds = array<i64: 1, 1, 1>, scalar_prefetch = 0 : i64, scratch_operands = 1 : i64, tpu.core_type = #tpu.core_type<tc>, window_params = [{transform_indices = @transform_0, window_bounds = array<i64: 128, 128>}, {transform_indices = @transform_1, window_bounds = array<i64: 128, 128>}, {transform_indices = @transform_2, window_bounds = array<i64: 128, 128>}, {transform_indices = @transform_3, window_bounds = array<i64: 128, 128>}]} {
    %c0_i32 = arith.constant 0 : i32
    %0 = arith.cmpi eq, %arg2, %c0_i32 : i32
    %1 = arith.extui %0 : i1 to i32
    %c0_i32_0 = arith.constant 0 : i32
    %2 = arith.cmpi ne, %1, %c0_i32_0 : i32
    scf.if %2 {
      %cst_13 = arith.constant 0.000000e+00 : f32
      %15 = vector.broadcast %cst_13 : f32 to vector<128x128xf32>
      %c0_14 = arith.constant 0 : index
      %c0_15 = arith.constant 0 : index
      %16 = vector.load %arg7[%c0_14, %c0_15] : memref<128x128xf32, #tpu.memory_space<vmem>>, vector<128x128xf32>
      tpu.vector_store %arg7[%c0_14, %c0_15], %15 {strides = array<i32>} : memref<128x128xf32, #tpu.memory_space<vmem>>, vector<128x128xf32>,
    } else {
    }
    %c0 = arith.constant 0 : index
    %c0_1 = arith.constant 0 : index
    %3 = vector.load %arg4[%c0, %c0_1] : memref<128x128xbf16, #tpu.memory_space<vmem>>, vector<128x128xbf16>
    %c0_2 = arith.constant 0 : index
    %c0_3 = arith.constant 0 : index
    %4 = vector.load %arg5[%c0_2, %c0_3] : memref<128x128xbf16, #tpu.memory_space<vmem>>, vector<128x128xbf16>
    %cst = arith.constant dense<0.000000e+00> : vector<128x128xf32>
    %5 = tpu.matmul %3, %4, %cst {dimension_numbers = #tpu.dot_dimension_numbers<[1], [0], [0], [1], [0, 0, 1, 1], [], []>} : vector<128x128xbf16>, vector<128x128xbf16>, vector<128x128xf32> -> vector<128x128xf32>
    %c0_4 = arith.constant 0 : index
    %c0_5 = arith.constant 0 : index
    %6 = vector.load %arg7[%c0_4, %c0_5] : memref<128x128xf32, #tpu.memory_space<vmem>>, vector<128x128xf32>
    %c0_6 = arith.constant 0 : index
    %c0_7 = arith.constant 0 : index
    %7 = vector.load %arg3[%c0_6, %c0_7] : memref<128x128xbf16, #tpu.memory_space<vmem>>, vector<128x128xbf16>
    %8 = arith.truncf %5 : vector<128x128xf32> to vector<128x128xbf16>
    %cst_8 = arith.constant dense<0.000000e+00> : vector<128x128xf32>
    %9 = tpu.matmul %7, %8, %cst_8 {dimension_numbers = #tpu.dot_dimension_numbers<[1], [0], [0], [1], [0, 0, 1, 1], [], []>} : vector<128x128xbf16>, vector<128x128xbf16>, vector<128x128xf32> -> vector<128x128xf32>
    %10 = arith.addf %6, %9 : vector<128x128xf32>
    %c0_9 = arith.constant 0 : index
    %c0_10 = arith.constant 0 : index
    %11 = vector.load %arg7[%c0_9, %c0_10] : memref<128x128xf32, #tpu.memory_space<vmem>>, vector<128x128xf32>
    tpu.vector_store %arg7[%c0_9, %c0_10], %10 {strides = array<i32>} : memref<128x128xf32, #tpu.memory_space<vmem>>, vector<128x128xf32>,
    %c0_i32_11 = arith.constant 0 : i32
    %12 = arith.cmpi eq, %arg2, %c0_i32_11 : i32
    %13 = arith.extui %12 : i1 to i32
    %c0_i32_12 = arith.constant 0 : i32
    %14 = arith.cmpi ne, %13, %c0_i32_12 : i32
    scf.if %14 {
      %c0_13 = arith.constant 0 : index
      %c0_14 = arith.constant 0 : index
      %15 = vector.load %arg7[%c0_13, %c0_14] : memref<128x128xf32, #tpu.memory_space<vmem>>, vector<128x128xf32>
      %cst_15 = arith.constant 0.000000e+00 : f32
      %16 = vector.broadcast %cst_15 : f32 to vector<128x128xf32>
      %17 = arith.maximumf %15, %16 : vector<128x128xf32>
      %c0_16 = arith.constant 0 : index
      %c0_17 = arith.constant 0 : index
      %18 = vector.load %arg6[%c0_16, %c0_17] : memref<128x128xf32, #tpu.memory_space<vmem>>, vector<128x128xf32>
      tpu.vector_store %arg6[%c0_16, %c0_17], %17 {strides = array<i32>} : memref<128x128xf32, #tpu.memory_space<vmem>>, vector<128x128xf32>,
    } else {
    }
    return
  }
  func.func @transform_0(%arg0: i32, %arg1: i32, %arg2: i32) -> (i32, i32) {
    %c0_i32 = arith.constant 0 : i32
    return %arg0, %arg2 : i32, i32
  }
  func.func @transform_1(%arg0: i32, %arg1: i32, %arg2: i32) -> (i32, i32) {
    %c0_i32 = arith.constant 0 : i32
    %c0_i32_0 = arith.constant 0 : i32
    return %arg2, %c0_i32 : i32, i32
  }
  func.func @transform_2(%arg0: i32, %arg1: i32, %arg2: i32) -> (i32, i32) {
    %c0_i32 = arith.constant 0 : i32
    %c0_i32_0 = arith.constant 0 : i32
    return %c0_i32, %arg1 : i32, i32
  }
  func.func @transform_3(%arg0: i32, %arg1: i32, %arg2: i32) -> (i32, i32) {
    %c0_i32 = arith.constant 0 : i32
    return %arg0, %arg1 : i32, i32
  }
}

</mosaic_0001>

<llo_original>
// kernel: tpu_custom_call.1
$region0: #{tpu_custom_call.1}
  #allocation0 [shape = 'u32[]', space=smem, size = 0x4, offset = 0x4, fixed_abs, tag = 'smem constant byte address 0x4 - core index']
  #allocation1 [shape = 'u32[144,128]{1,0:T(1,128)}', space=vmem, size = 0x12000, scoped, tag = 'internal scratch']
  #allocation2 [shape = 'f32[128,128]{1,0:T(8,128)}', space=vmem, size = 0x10000, scoped, tag = 'scratch operand']
  %s0 = inlined_call_operand.hbm [shape: bf16[128,128], index: 0, kind: input, shape index: {}]
  %s1 = inlined_call_operand.hbm [shape: bf16[128,128], index: 1, kind: input, shape index: {}]
  %s2 = inlined_call_operand.hbm [shape: bf16[128,128], index: 2, kind: input, shape index: {}]
  %s3 = inlined_call_operand.hbm [shape: f32[128,128], index: 3, kind: output, shape index: {}]
  %s4 = sld [smem:[#allocation0]]
  $region42: #{tpu_custom_call.1} parent=0
    _
  %s6 = ssub.s32 1, %s4
  %s7 = scalar_select 0, %s6, %s4
  $region1: #{tpu_custom_call.1} parent=0
    #allocation3 [shape = 'u8[32768]{0}', space=vmem, size = 0x8000, scoped, tag = 'input window, operand 0, single buffered']
    #allocation4 [shape = 's32[1]{0}', space=sflag, size = 0x4, scoped, tag = 'scoped memory for tpu_custom_call.1']
    #allocation5 [shape = 's32[1]{0}', space=sflag, size = 0x4, scoped, tag = 'scoped memory for tpu_custom_call.1']
    #allocation6 [shape = 'u8[32768]{0}', space=vmem, size = 0x8000, scoped, tag = 'input window, operand 1, single buffered']
    #allocation7 [shape = 's32[1]{0}', space=sflag, size = 0x4, scoped, tag = 'scoped memory for tpu_custom_call.1']
    #allocation8 [shape = 'u8[32768]{0}', space=vmem, size = 0x8000, scoped, tag = 'input window, operand 2, single buffered']
    #allocation9 [shape = 'u8[65536]{0}', space=vmem, size = 0x10000, scoped, tag = 'output window, operand 0, single buffered']
    %8 = vsyncpa [#allocation4], 0
    %9 = vsyncpa [#allocation7], 0
    %10 = vsyncpa [#allocation5], 0
    // Predicated region
    $region2: #{tpu_custom_call.1} parent=1 // pred_check
      _
    $region3: #{tpu_custom_call.1} parent=1 // pred_check_branch
      %12 = sbr.rel (0) target = $region5
    $region4: #{tpu_custom_call.1} parent=1 // pred_region
      %s14 = ssub.s32 1024, 1024
      %15 = vsyncadd [#allocation4], %s14
      %s16 = sshll.u32 [#allocation3], 4
      %s17 = int_to_ptr.vmem [resolvable:$true] %s16
      %22 = dma.hbm_to_vmem [thread:$0]  %s0, 1024, %s17, [#allocation4], 64, 64, 4
    $region5: #{tpu_custom_call.1} parent=1 // pred_fallthru
      _
    // Predicated region
    $region6: #{tpu_custom_call.1} parent=1 // pred_check
      _
    $region7: #{tpu_custom_call.1} parent=1 // pred_check_branch
      %24 = sbr.rel (0) target = $region9
    $region8: #{tpu_custom_call.1} parent=1 // pred_region
      %s26 = ssub.s32 1024, 1024
      %27 = vsyncadd [#allocation7], %s26
      %s28 = sshll.u32 [#allocation6], 4
      %s29 = int_to_ptr.vmem [resolvable:$true] %s28
      %34 = dma.hbm_to_vmem [thread:$0]  %s1, 1024, %s29, [#allocation7], 64, 64, 4
    $region9: #{tpu_custom_call.1} parent=1 // pred_fallthru
      _
    // Predicated region
    $region10: #{tpu_custom_call.1} parent=1 // pred_check
      _
    $region11: #{tpu_custom_call.1} parent=1 // pred_check_branch
      %36 = sbr.rel (0) target = $region13
    $region12: #{tpu_custom_call.1} parent=1 // pred_region
      %s38 = ssub.s32 1024, 1024
      %39 = vsyncadd [#allocation7], %s38
      %s40 = sshll.u32 [#allocation8], 4
      %s41 = int_to_ptr.vmem [resolvable:$true] %s40
      %46 = dma.hbm_to_vmem [thread:$0]  %s2, 1024, %s41, [#allocation7], 64, 64, 4
    $region13: #{tpu_custom_call.1} parent=1 // pred_fallthru
      _
    // Predicated region
    $region14: #{tpu_custom_call.1} parent=1 // pred_check
      _
    $region15: #{tpu_custom_call.1} parent=1 // pred_check_branch
      %48 = sbr.rel (0) target = $region17
    $region16: #{tpu_custom_call.1} parent=1 // pred_region
      %49 = dma.done [#allocation4], 1024
    $region17: #{tpu_custom_call.1} parent=1 // pred_fallthru
      _
    // Predicated region
    $region18: #{tpu_custom_call.1} parent=1 // pred_check
      _
    $region19: #{tpu_custom_call.1} parent=1 // pred_check_branch
      %51 = sbr.rel (0) target = $region21
    $region20: #{tpu_custom_call.1} parent=1 // pred_region
      %52 = dma.done [#allocation7], 1024
    $region21: #{tpu_custom_call.1} parent=1 // pred_fallthru
      _
    // Predicated region
    $region22: #{tpu_custom_call.1} parent=1 // pred_check
      _
    $region23: #{tpu_custom_call.1} parent=1 // pred_check_branch
      %54 = sbr.rel (0) target = $region25
    $region24: #{tpu_custom_call.1} parent=1 // pred_region
      %55 = dma.done [#allocation7], 1024
    $region25: #{tpu_custom_call.1} parent=1 // pred_fallthru
      _
    %p57 = scmp.eq.s32.totalorder 0, 0
    // Predicated region
    $region26: #{tpu_custom_call.1} parent=1 // pred_check
      %p58 = pneg %p57
    $region27: #{tpu_custom_call.1} parent=1 // pred_check_branch
      %60 = sbr.rel (%p58) target = $region29
    $region28: #{tpu_custom_call.1} parent=1 // pred_region
      %61 = vst [vmem:[#allocation2] sm:$0xff] 0.0
      %62 = vst [vmem:[#allocation2 + $0x8] sm:$0xff] 0.0
      %63 = vst [vmem:[#allocation2 + $0x10] sm:$0xff] 0.0
      %64 = vst [vmem:[#allocation2 + $0x18] sm:$0xff] 0.0
      %65 = vst [vmem:[#allocation2 + $0x20] sm:$0xff] 0.0
      %66 = vst [vmem:[#allocation2 + $0x28] sm:$0xff] 0.0
      %67 = vst [vmem:[#allocation2 + $0x30] sm:$0xff] 0.0
      %68 = vst [vmem:[#allocation2 + $0x38] sm:$0xff] 0.0
      %69 = vst [vmem:[#allocation2 + $0x40] sm:$0xff] 0.0
      %70 = vst [vmem:[#allocation2 + $0x48] sm:$0xff] 0.0
      %71 = vst [vmem:[#allocation2 + $0x50] sm:$0xff] 0.0
      %72 = vst [vmem:[#allocation2 + $0x58] sm:$0xff] 0.0
      %73 = vst [vmem:[#allocation2 + $0x60] sm:$0xff] 0.0
      %74 = vst [vmem:[#allocation2 + $0x68] sm:$0xff] 0.0
      %75 = vst [vmem:[#allocation2 + $0x70] sm:$0xff] 0.0
      %76 = vst [vmem:[#allocation2 + $0x78] sm:$0xff] 0.0
    $region29: #{tpu_custom_call.1} parent=1 // pred_fallthru
      _
    %v77 = vld [vmem:[#allocation6] sm:$0xf]
    %v78 = vld [vmem:[#allocation6 + $0x4] sm:$0xf]
    %v79 = vld [vmem:[#allocation6 + $0x8] sm:$0xf]
    %v80 = vld [vmem:[#allocation6 + $0xc] sm:$0xf]
    %v81 = vld [vmem:[#allocation6 + $0x10] sm:$0xf]
    %v82 = vld [vmem:[#allocation6 + $0x14] sm:$0xf]
    %v83 = vld [vmem:[#allocation6 + $0x18] sm:$0xf]
    %v84 = vld [vmem:[#allocation6 + $0x1c] sm:$0xf]
    %v85 = vld [vmem:[#allocation6 + $0x20] sm:$0xf]
    %v86 = vld [vmem:[#allocation6 + $0x24] sm:$0xf]
    %v87 = vld [vmem:[#allocation6 + $0x28] sm:$0xf]
    %v88 = vld [vmem:[#allocation6 + $0x2c] sm:$0xf]
    %v89 = vld [vmem:[#allocation6 + $0x30] sm:$0xf]
    %v90 = vld [vmem:[#allocation6 + $0x34] sm:$0xf]
    %v91 = vld [vmem:[#allocation6 + $0x38] sm:$0xf]
    %v92 = vld [vmem:[#allocation6 + $0x3c] sm:$0xf]
    %v93 = vld [vmem:[#allocation8] sm:$0xf]
    %v94 = vld [vmem:[#allocation8 + $0x4] sm:$0xf]
    %v95 = vld [vmem:[#allocation8 + $0x8] sm:$0xf]
    %v96 = vld [vmem:[#allocation8 + $0xc] sm:$0xf]
    %v97 = vld [vmem:[#allocation8 + $0x10] sm:$0xf]
    %v98 = vld [vmem:[#allocation8 + $0x14] sm:$0xf]
    %v99 = vld [vmem:[#allocation8 + $0x18] sm:$0xf]
    %v100 = vld [vmem:[#allocation8 + $0x1c] sm:$0xf]
    %v101 = vld [vmem:[#allocation8 + $0x20] sm:$0xf]
    %v102 = vld [vmem:[#allocation8 + $0x24] sm:$0xf]
    %v103 = vld [vmem:[#allocation8 + $0x28] sm:$0xf]
    %v104 = vld [vmem:[#allocation8 + $0x2c] sm:$0xf]
    %v105 = vld [vmem:[#allocation8 + $0x30] sm:$0xf]
    %v106 = vld [vmem:[#allocation8 + $0x34] sm:$0xf]
    %v107 = vld [vmem:[#allocation8 + $0x38] sm:$0xf]
    %v108 = vld [vmem:[#allocation8 + $0x3c] sm:$0xf]
    %v125 = vunpack.c.l.b16 %v77
    %v126 = vunpack.c.l.b16 %v78
    %v127 = vunpack.c.l.b16 %v79
    %v128 = vunpack.c.l.b16 %v80
    %v129 = vunpack.c.l.b16 %v81
    %v130 = vunpack.c.l.b16 %v82
    %v131 = vunpack.c.l.b16 %v83
    %v132 = vunpack.c.l.b16 %v84
    %v133 = vunpack.c.l.b16 %v85
    %v134 = vunpack.c.l.b16 %v86
    %v135 = vunpack.c.l.b16 %v87
    %v136 = vunpack.c.l.b16 %v88
    %v137 = vunpack.c.l.b16 %v89
    %v138 = vunpack.c.l.b16 %v90
    %v139 = vunpack.c.l.b16 %v91
    %v140 = vunpack.c.l.b16 %v92
    %v141 = vpack.c.b16 %v126, %v125
    %v142 = vpack.c.b16 %v128, %v127
    %v143 = vpack.c.b16 %v130, %v129
    %v144 = vpack.c.b16 %v132, %v131
    %v145 = vpack.c.b16 %v134, %v133
    %v146 = vpack.c.b16 %v136, %v135
    %v147 = vpack.c.b16 %v138, %v137
    %v148 = vpack.c.b16 %v140, %v139
    %v173 = vunpack.c.l.b16 %v93
    %v174 = vunpack.c.l.b16 %v94
    %v175 = vunpack.c.l.b16 %v95
    %v176 = vunpack.c.l.b16 %v96
    %v177 = vunpack.c.l.b16 %v97
    %v178 = vunpack.c.l.b16 %v98
    %v179 = vunpack.c.l.b16 %v99
    %v180 = vunpack.c.l.b16 %v100
    %v181 = vunpack.c.l.b16 %v101
    %v182 = vunpack.c.l.b16 %v102
    %v183 = vunpack.c.l.b16 %v103
    %v184 = vunpack.c.l.b16 %v104
    %v185 = vunpack.c.l.b16 %v105
    %v186 = vunpack.c.l.b16 %v106
    %v187 = vunpack.c.l.b16 %v107
    %v188 = vunpack.c.l.b16 %v108
    %v189 = vpack.c.b16 %v174, %v173
    %v190 = vpack.c.b16 %v176, %v175
    %v191 = vpack.c.b16 %v178, %v177
    %v192 = vpack.c.b16 %v180, %v179
    %v193 = vpack.c.b16 %v182, %v181
    %v194 = vpack.c.b16 %v184, %v183
    %v195 = vpack.c.b16 %v186, %v185
    %v196 = vpack.c.b16 %v188, %v187
    %205 = vmatprep.subr.bf16.mxu0 0
    %206 = vmatpush1.bf16.msra.mxu0 %v196
    %207 = vmatprep.subr.bf16.mxu0 0
    %208 = vmatpush1.bf16.msra.mxu0 %v195
    %209 = vmatprep.subr.bf16.mxu0 0
    %210 = vmatpush1.bf16.msra.mxu0 %v194
    %211 = vmatprep.subr.bf16.mxu0 0
    %212 = vmatpush1.bf16.msra.mxu0 %v193
    %213 = vmatprep.subr.bf16.mxu0 0
    %214 = vmatpush1.bf16.msra.mxu0 %v192
    %215 = vmatprep.subr.bf16.mxu0 0
    %216 = vmatpush1.bf16.msra.mxu0 %v191
    %217 = vmatprep.subr.bf16.mxu0 0
    %218 = vmatpush1.bf16.msra.mxu0 %v190
    %219 = vmatprep.subr.bf16.mxu0 0
    %220 = vmatpush1.bf16.msra.mxu0 %v189
    %221 = vmatprep.subr.bf16.mxu0 0
    %222 = vmatpush2.bf16.msra.mxu0 0
    %223 = vmatprep.subr.bf16.mxu0 0
    %224 = vmatpush2.bf16.msra.mxu0 0
    %225 = vmatprep.subr.bf16.mxu0 0
    %226 = vmatpush2.bf16.msra.mxu0 0
    %227 = vmatprep.subr.bf16.mxu0 0
    %228 = vmatpush2.bf16.msra.mxu0 0
    %229 = vmatprep.subr.bf16.mxu0 0
    %230 = vmatpush2.bf16.msra.mxu0 0
    %231 = vmatprep.subr.bf16.mxu0 0
    %232 = vmatpush2.bf16.msra.mxu0 0
    %233 = vmatprep.subr.bf16.mxu0 0
    %234 = vmatpush2.bf16.msra.mxu0 0
    %235 = vmatprep.subr.bf16.mxu0 0
    %236 = vmatpush2.bf16.msra.mxu0 0
    %237 = vmatprep.mubr.bf16.mxu0 0
    %238 = vmatmul.mubr.bf16.gmra.mxu0 %v141
    %v239 = vpop.f32.mrf.mxu0
    %v240 = vadd.f32 0.0, %v239
    %v241 = vpop.f32.mrf.mxu0
    %v242 = vpop.f32.mrf.mxu0
    %v243 = vadd.f32 0.0, %v242
    %v244 = vpop.f32.mrf.mxu0
    %245 = vmatprep.mubr.bf16.mxu0 0
    %246 = vmatmul.mubr.bf16.gmra.mxu0 %v142
    %v247 = vpop.f32.mrf.mxu0
    %v248 = vadd.f32 0.0, %v247
    %v249 = vpop.f32.mrf.mxu0
    %v250 = vpop.f32.mrf.mxu0
    %v251 = vadd.f32 0.0, %v250
    %v252 = vpop.f32.mrf.mxu0
    %253 = vmatprep.mubr.bf16.mxu0 0
    %254 = vmatmul.mubr.bf16.gmra.mxu0 %v143
    %v255 = vpop.f32.mrf.mxu0
    %v256 = vadd.f32 0.0, %v255
    %v257 = vpop.f32.mrf.mxu0
    %v258 = vpop.f32.mrf.mxu0
    %v259 = vadd.f32 0.0, %v258
    %v260 = vpop.f32.mrf.mxu0
    %261 = vmatprep.mubr.bf16.mxu0 0
    %262 = vmatmul.mubr.bf16.gmra.mxu0 %v144
    %v263 = vpop.f32.mrf.mxu0
    %v264 = vadd.f32 0.0, %v263
    %v265 = vpop.f32.mrf.mxu0
    %v266 = vpop.f32.mrf.mxu0
    %v267 = vadd.f32 0.0, %v266
    %v268 = vpop.f32.mrf.mxu0
    %269 = vmatprep.mubr.bf16.mxu0 0
    %270 = vmatmul.mubr.bf16.gmra.mxu0 %v145
    %v271 = vpop.f32.mrf.mxu0
    %v272 = vadd.f32 0.0, %v271
    %v273 = vpop.f32.mrf.mxu0
    %v274 = vpop.f32.mrf.mxu0
    %v275 = vadd.f32 0.0, %v274
    %v276 = vpop.f32.mrf.mxu0
    %277 = vmatprep.mubr.bf16.mxu0 0
    %278 = vmatmul.mubr.bf16.gmra.mxu0 %v146
    %v279 = vpop.f32.mrf.mxu0
    %v280 = vadd.f32 0.0, %v279
    %v281 = vpop.f32.mrf.mxu0
    %v282 = vpop.f32.mrf.mxu0
    %v283 = vadd.f32 0.0, %v282
    %v284 = vpop.f32.mrf.mxu0
    %285 = vmatprep.mubr.bf16.mxu0 0
    %286 = vmatmul.mubr.bf16.gmra.mxu0 %v147
    %v287 = vpop.f32.mrf.mxu0
    %v288 = vadd.f32 0.0, %v287
    %v289 = vpop.f32.mrf.mxu0
    %v290 = vpop.f32.mrf.mxu0
    %v291 = vadd.f32 0.0, %v290
    %v292 = vpop.f32.mrf.mxu0
    %293 = vmatprep.mubr.bf16.mxu0 0
    %294 = vmatmul.mubr.bf16.gmra.mxu0 %v148
    %v295 = vpop.f32.mrf.mxu0
    %v296 = vadd.f32 0.0, %v295
    %v297 = vpop.f32.mrf.mxu0
    %v298 = vpop.f32.mrf.mxu0
    %v299 = vadd.f32 0.0, %v298
    %v300 = vpop.f32.mrf.mxu0
    %301 = vdwg.mxu0
    %v302 = vld [vmem:[#allocation2] sm:$0xff]
    %v303 = vld [vmem:[#allocation2 + $0x8] sm:$0xff]
    %v304 = vld [vmem:[#allocation2 + $0x10] sm:$0xff]
    %v305 = vld [vmem:[#allocation2 + $0x18] sm:$0xff]
    %v306 = vld [vmem:[#allocation2 + $0x20] sm:$0xff]
    %v307 = vld [vmem:[#allocation2 + $0x28] sm:$0xff]
    %v308 = vld [vmem:[#allocation2 + $0x30] sm:$0xff]
    %v309 = vld [vmem:[#allocation2 + $0x38] sm:$0xff]
    %v310 = vld [vmem:[#allocation2 + $0x40] sm:$0xff]
    %v311 = vld [vmem:[#allocation2 + $0x48] sm:$0xff]
    %v312 = vld [vmem:[#allocation2 + $0x50] sm:$0xff]
    %v313 = vld [vmem:[#allocation2 + $0x58] sm:$0xff]
    %v314 = vld [vmem:[#allocation2 + $0x60] sm:$0xff]
    %v315 = vld [vmem:[#allocation2 + $0x68] sm:$0xff]
    %v316 = vld [vmem:[#allocation2 + $0x70] sm:$0xff]
    %v317 = vld [vmem:[#allocation2 + $0x78] sm:$0xff]
    %v318 = vld [vmem:[#allocation3] sm:$0xf]
    %v319 = vld [vmem:[#allocation3 + $0x4] sm:$0xf]
    %v320 = vld [vmem:[#allocation3 + $0x8] sm:$0xf]
    %v321 = vld [vmem:[#allocation3 + $0xc] sm:$0xf]
    %v322 = vld [vmem:[#allocation3 + $0x10] sm:$0xf]
    %v323 = vld [vmem:[#allocation3 + $0x14] sm:$0xf]
    %v324 = vld [vmem:[#allocation3 + $0x18] sm:$0xf]
    %v325 = vld [vmem:[#allocation3 + $0x1c] sm:$0xf]
    %v326 = vld [vmem:[#allocation3 + $0x20] sm:$0xf]
    %v327 = vld [vmem:[#allocation3 + $0x24] sm:$0xf]
    %v328 = vld [vmem:[#allocation3 + $0x28] sm:$0xf]
    %v329 = vld [vmem:[#allocation3 + $0x2c] sm:$0xf]
    %v330 = vld [vmem:[#allocation3 + $0x30] sm:$0xf]
    %v331 = vld [vmem:[#allocation3 + $0x34] sm:$0xf]
    %v332 = vld [vmem:[#allocation3 + $0x38] sm:$0xf]
    %v333 = vld [vmem:[#allocation3 + $0x3c] sm:$0xf]
    %v334 = vpack.c.bf16 %v243, %v240
    %v335 = vpack.c.bf16 %v251, %v248
    %v336 = vpack.c.bf16 %v259, %v256
    %v337 = vpack.c.bf16 %v267, %v264
    %v338 = vpack.c.bf16 %v275, %v272
    %v339 = vpack.c.bf16 %v283, %v280
    %v340 = vpack.c.bf16 %v291, %v288
    %v341 = vpack.c.bf16 %v299, %v296
    %v358 = vunpack.c.l.b16 %v318
    %v359 = vunpack.c.l.b16 %v319
    %v360 = vunpack.c.l.b16 %v320
    %v361 = vunpack.c.l.b16 %v321
    %v362 = vunpack.c.l.b16 %v322
    %v363 = vunpack.c.l.b16 %v323
    %v364 = vunpack.c.l.b16 %v324
    %v365 = vunpack.c.l.b16 %v325
    %v366 = vunpack.c.l.b16 %v326
    %v367 = vunpack.c.l.b16 %v327
    %v368 = vunpack.c.l.b16 %v328
    %v369 = vunpack.c.l.b16 %v329
    %v370 = vunpack.c.l.b16 %v330
    %v371 = vunpack.c.l.b16 %v331
    %v372 = vunpack.c.l.b16 %v332
    %v373 = vunpack.c.l.b16 %v333
    %v374 = vpack.c.b16 %v359, %v358
    %v375 = vpack.c.b16 %v361, %v360
    %v376 = vpack.c.b16 %v363, %v362
    %v377 = vpack.c.b16 %v365, %v364
    %v378 = vpack.c.b16 %v367, %v366
    %v379 = vpack.c.b16 %v369, %v368
    %v380 = vpack.c.b16 %v371, %v370
    %v381 = vpack.c.b16 %v373, %v372
    %390 = vmatprep.subr.bf16.mxu0 0
    %391 = vmatpush1.bf16.msra.mxu0 %v341
    %392 = vmatprep.subr.bf16.mxu0 0
    %393 = vmatpush1.bf16.msra.mxu0 %v340
    %394 = vmatprep.subr.bf16.mxu0 0
    %395 = vmatpush1.bf16.msra.mxu0 %v339
    %396 = vmatprep.subr.bf16.mxu0 0
    %397 = vmatpush1.bf16.msra.mxu0 %v338
    %398 = vmatprep.subr.bf16.mxu0 0
    %399 = vmatpush1.bf16.msra.mxu0 %v337
    %400 = vmatprep.subr.bf16.mxu0 0
    %401 = vmatpush1.bf16.msra.mxu0 %v336
    %402 = vmatprep.subr.bf16.mxu0 0
    %403 = vmatpush1.bf16.msra.mxu0 %v335
    %404 = vmatprep.subr.bf16.mxu0 0
    %405 = vmatpush1.bf16.msra.mxu0 %v334
    %406 = vmatprep.subr.bf16.mxu0 0
    %407 = vmatpush2.bf16.msra.mxu0 0
    %408 = vmatprep.subr.bf16.mxu0 0
    %409 = vmatpush2.bf16.msra.mxu0 0
    %410 = vmatprep.subr.bf16.mxu0 0
    %411 = vmatpush2.bf16.msra.mxu0 0
    %412 = vmatprep.subr.bf16.mxu0 0
    %413 = vmatpush2.bf16.msra.mxu0 0
    %414 = vmatprep.subr.bf16.mxu0 0
    %415 = vmatpush2.bf16.msra.mxu0 0
    %416 = vmatprep.subr.bf16.mxu0 0
    %417 = vmatpush2.bf16.msra.mxu0 0
    %418 = vmatprep.subr.bf16.mxu0 0
    %419 = vmatpush2.bf16.msra.mxu0 0
    %420 = vmatprep.subr.bf16.mxu0 0
    %421 = vmatpush2.bf16.msra.mxu0 0
    %422 = vmatprep.mubr.bf16.mxu0 0
    %423 = vmatmul.mubr.bf16.gmra.mxu0 %v374
    %v424 = vpop.f32.mrf.mxu0
    %v425 = vadd.f32 0.0, %v424
    %v426 = vpop.f32.mrf.mxu0
    %v427 = vpop.f32.mrf.mxu0
    %v428 = vadd.f32 0.0, %v427
    %v429 = vpop.f32.mrf.mxu0
    %430 = vmatprep.mubr.bf16.mxu0 0
    %431 = vmatmul.mubr.bf16.gmra.mxu0 %v375
    %v432 = vpop.f32.mrf.mxu0
    %v433 = vadd.f32 0.0, %v432
    %v434 = vpop.f32.mrf.mxu0
    %v435 = vpop.f32.mrf.mxu0
    %v436 = vadd.f32 0.0, %v435
    %v437 = vpop.f32.mrf.mxu0
    %438 = vmatprep.mubr.bf16.mxu0 0
    %439 = vmatmul.mubr.bf16.gmra.mxu0 %v376
    %v440 = vpop.f32.mrf.mxu0
    %v441 = vadd.f32 0.0, %v440
    %v442 = vpop.f32.mrf.mxu0
    %v443 = vpop.f32.mrf.mxu0
    %v444 = vadd.f32 0.0, %v443
    %v445 = vpop.f32.mrf.mxu0
    %446 = vmatprep.mubr.bf16.mxu0 0
    %447 = vmatmul.mubr.bf16.gmra.mxu0 %v377
    %v448 = vpop.f32.mrf.mxu0
    %v449 = vadd.f32 0.0, %v448
    %v450 = vpop.f32.mrf.mxu0
    %v451 = vpop.f32.mrf.mxu0
    %v452 = vadd.f32 0.0, %v451
    %v453 = vpop.f32.mrf.mxu0
    %454 = vmatprep.mubr.bf16.mxu0 0
    %455 = vmatmul.mubr.bf16.gmra.mxu0 %v378
    %v456 = vpop.f32.mrf.mxu0
    %v457 = vadd.f32 0.0, %v456
    %v458 = vpop.f32.mrf.mxu0
    %v459 = vpop.f32.mrf.mxu0
    %v460 = vadd.f32 0.0, %v459
    %v461 = vpop.f32.mrf.mxu0
    %462 = vmatprep.mubr.bf16.mxu0 0
    %463 = vmatmul.mubr.bf16.gmra.mxu0 %v379
    %v464 = vpop.f32.mrf.mxu0
    %v465 = vadd.f32 0.0, %v464
    %v466 = vpop.f32.mrf.mxu0
    %v467 = vpop.f32.mrf.mxu0
    %v468 = vadd.f32 0.0, %v467
    %v469 = vpop.f32.mrf.mxu0
    %470 = vmatprep.mubr.bf16.mxu0 0
    %471 = vmatmul.mubr.bf16.gmra.mxu0 %v380
    %v472 = vpop.f32.mrf.mxu0
    %v473 = vadd.f32 0.0, %v472
    %v474 = vpop.f32.mrf.mxu0
    %v475 = vpop.f32.mrf.mxu0
    %v476 = vadd.f32 0.0, %v475
    %v477 = vpop.f32.mrf.mxu0
    %478 = vmatprep.mubr.bf16.mxu0 0
    %479 = vmatmul.mubr.bf16.gmra.mxu0 %v381
    %v480 = vpop.f32.mrf.mxu0
    %v481 = vadd.f32 0.0, %v480
    %v482 = vpop.f32.mrf.mxu0
    %v483 = vpop.f32.mrf.mxu0
    %v484 = vadd.f32 0.0, %v483
    %v485 = vpop.f32.mrf.mxu0
    %486 = vdwg.mxu0
    %v487 = vadd.f32 %v302, %v425
    %v488 = vadd.f32 %v303, %v428
    %v489 = vadd.f32 %v304, %v433
    %v490 = vadd.f32 %v305, %v436
    %v491 = vadd.f32 %v306, %v441
    %v492 = vadd.f32 %v307, %v444
    %v493 = vadd.f32 %v308, %v449
    %v494 = vadd.f32 %v309, %v452
    %v495 = vadd.f32 %v310, %v457
    %v496 = vadd.f32 %v311, %v460
    %v497 = vadd.f32 %v312, %v465
    %v498 = vadd.f32 %v313, %v468
    %v499 = vadd.f32 %v314, %v473
    %v500 = vadd.f32 %v315, %v476
    %v501 = vadd.f32 %v316, %v481
    %v502 = vadd.f32 %v317, %v484
    %503 = vst [vmem:[#allocation2] sm:$0xff] %v487
    %504 = vst [vmem:[#allocation2 + $0x8] sm:$0xff] %v488
    %505 = vst [vmem:[#allocation2 + $0x10] sm:$0xff] %v489
    %506 = vst [vmem:[#allocation2 + $0x18] sm:$0xff] %v490
    %507 = vst [vmem:[#allocation2 + $0x20] sm:$0xff] %v491
    %508 = vst [vmem:[#allocation2 + $0x28] sm:$0xff] %v492
    %509 = vst [vmem:[#allocation2 + $0x30] sm:$0xff] %v493
    %510 = vst [vmem:[#allocation2 + $0x38] sm:$0xff] %v494
    %511 = vst [vmem:[#allocation2 + $0x40] sm:$0xff] %v495
    %512 = vst [vmem:[#allocation2 + $0x48] sm:$0xff] %v496
    %513 = vst [vmem:[#allocation2 + $0x50] sm:$0xff] %v497
    %514 = vst [vmem:[#allocation2 + $0x58] sm:$0xff] %v498
    %515 = vst [vmem:[#allocation2 + $0x60] sm:$0xff] %v499
    %516 = vst [vmem:[#allocation2 + $0x68] sm:$0xff] %v500
    %517 = vst [vmem:[#allocation2 + $0x70] sm:$0xff] %v501
    %518 = vst [vmem:[#allocation2 + $0x78] sm:$0xff] %v502
    // Predicated region
    $region30: #{tpu_custom_call.1} parent=1 // pred_check
      %p519 = pneg %p57
    $region31: #{tpu_custom_call.1} parent=1 // pred_check_branch
      %521 = sbr.rel (%p519) target = $region33
    $region32: #{tpu_custom_call.1} parent=1 // pred_region
      %v522 = vld [vmem:[#allocation2] sm:$0xff]
      %v523 = vld [vmem:[#allocation2 + $0x8] sm:$0xff]
      %v524 = vld [vmem:[#allocation2 + $0x10] sm:$0xff]
      %v525 = vld [vmem:[#allocation2 + $0x18] sm:$0xff]
      %v526 = vld [vmem:[#allocation2 + $0x20] sm:$0xff]
      %v527 = vld [vmem:[#allocation2 + $0x28] sm:$0xff]
      %v528 = vld [vmem:[#allocation2 + $0x30] sm:$0xff]
      %v529 = vld [vmem:[#allocation2 + $0x38] sm:$0xff]
      %v530 = vld [vmem:[#allocation2 + $0x40] sm:$0xff]
      %v531 = vld [vmem:[#allocation2 + $0x48] sm:$0xff]
      %v532 = vld [vmem:[#allocation2 + $0x50] sm:$0xff]
      %v533 = vld [vmem:[#allocation2 + $0x58] sm:$0xff]
      %v534 = vld [vmem:[#allocation2 + $0x60] sm:$0xff]
      %v535 = vld [vmem:[#allocation2 + $0x68] sm:$0xff]
      %v536 = vld [vmem:[#allocation2 + $0x70] sm:$0xff]
      %v537 = vld [vmem:[#allocation2 + $0x78] sm:$0xff]
      %v538 = vmax.f32 %v522, 0.0
      %v539 = vmax.f32 %v523, 0.0
      %v540 = vmax.f32 %v524, 0.0
      %v541 = vmax.f32 %v525, 0.0
      %v542 = vmax.f32 %v526, 0.0
      %v543 = vmax.f32 %v527, 0.0
      %v544 = vmax.f32 %v528, 0.0
      %v545 = vmax.f32 %v529, 0.0
      %v546 = vmax.f32 %v530, 0.0
      %v547 = vmax.f32 %v531, 0.0
      %v548 = vmax.f32 %v532, 0.0
      %v549 = vmax.f32 %v533, 0.0
      %v550 = vmax.f32 %v534, 0.0
      %v551 = vmax.f32 %v535, 0.0
      %v552 = vmax.f32 %v536, 0.0
      %v553 = vmax.f32 %v537, 0.0
      %554 = vst [vmem:[#allocation9] sm:$0xff] %v538
      %555 = vst [vmem:[#allocation9 + $0x8] sm:$0xff] %v539
      %556 = vst [vmem:[#allocation9 + $0x10] sm:$0xff] %v540
      %557 = vst [vmem:[#allocation9 + $0x18] sm:$0xff] %v541
      %558 = vst [vmem:[#allocation9 + $0x20] sm:$0xff] %v542
      %559 = vst [vmem:[#allocation9 + $0x28] sm:$0xff] %v543
      %560 = vst [vmem:[#allocation9 + $0x30] sm:$0xff] %v544
      %561 = vst [vmem:[#allocation9 + $0x38] sm:$0xff] %v545
      %562 = vst [vmem:[#allocation9 + $0x40] sm:$0xff] %v546
      %563 = vst [vmem:[#allocation9 + $0x48] sm:$0xff] %v547
      %564 = vst [vmem:[#allocation9 + $0x50] sm:$0xff] %v548
      %565 = vst [vmem:[#allocation9 + $0x58] sm:$0xff] %v549
      %566 = vst [vmem:[#allocation9 + $0x60] sm:$0xff] %v550
      %567 = vst [vmem:[#allocation9 + $0x68] sm:$0xff] %v551
      %568 = vst [vmem:[#allocation9 + $0x70] sm:$0xff] %v552
      %569 = vst [vmem:[#allocation9 + $0x78] sm:$0xff] %v553
    $region33: #{tpu_custom_call.1} parent=1 // pred_fallthru
      _
    // Predicated region
    $region34: #{tpu_custom_call.1} parent=1 // pred_check
      _
    $region35: #{tpu_custom_call.1} parent=1 // pred_check_branch
      %571 = sbr.rel (0) target = $region37
    $region36: #{tpu_custom_call.1} parent=1 // pred_region
      %s573 = ssub.s32 2048, 2048
      %574 = vsyncadd [#allocation5], %s573
      %s575 = sshll.u32 [#allocation9], 4
      %s576 = int_to_ptr.vmem [resolvable:$true] %s575
      %581 = dma.vmem_to_hbm [thread:$0]  %s576, 2048, %s3, [#allocation5], 128, 128, 8
    $region37: #{tpu_custom_call.1} parent=1 // pred_fallthru
      _
    // Predicated region
    $region38: #{tpu_custom_call.1} parent=1 // pred_check
      _
    $region39: #{tpu_custom_call.1} parent=1 // pred_check_branch
      %583 = sbr.rel (0) target = $region41
    $region40: #{tpu_custom_call.1} parent=1 // pred_region
      %584 = dma.done [#allocation5], 2048
    $region41: #{tpu_custom_call.1} parent=1 // pred_fallthru
      _
    %585 = vsyncpa [#allocation4], 1
    %586 = vsyncpa [#allocation7], 1
    %587 = vsyncpa [#allocation5], 1

</llo_original>
